<compile_context>
chip_gen: v7x
topology: tpu7x:2x2x1
jax: 0.10.0
libtpu: 0.0.40
codegen_flags: <defaults>
</compile_context>

<pallas_src>
import jax
import jax.numpy as jnp
from jax.experimental import pallas as pl
from jax.experimental.pallas import tpu as pltpu

LANES = 128        # lane width (last dim of every tile)
SUBLANES = 8       # f32 sublane tile
CHUNK_ROWS = 512   # in-kernel sub-chunk: bounds live ranges of the elementwise chain

# dtypes we stream natively, mapped to their sublane granularity
_STREAM_SUBLANES = {
    jnp.dtype(jnp.float32): 8,
    jnp.dtype(jnp.int32): 8,
    jnp.dtype(jnp.uint32): 8,
    jnp.dtype(jnp.bfloat16): 16,
    jnp.dtype(jnp.float16): 16,
    jnp.dtype(jnp.int16): 16,
    jnp.dtype(jnp.uint16): 16,
    jnp.dtype(jnp.int8): 32,
    jnp.dtype(jnp.uint8): 32,
}


def _poisson_deviance_kernel(yt_ref, yp_ref, sum_ref, bad_ref):
    """Accumulate per-(sublane, lane) partial sums of (term1 - term2).

    sum_ref: (8, 128) f32 accumulator, resident across the inner grid axis.
    bad_ref: (8, 128) i32 accumulator counting y_pred <= 0 occurrences.
    """
    @pl.when(pl.program_id(1) == 0)
    def _():
        sum_ref[...] = jnp.zeros_like(sum_ref)
        bad_ref[...] = jnp.zeros_like(bad_ref)

    tile_rows = yt_ref.shape[0]
    chunk = min(CHUNK_ROWS, tile_rows)
    n_chunks = tile_rows // chunk          # wrapper guarantees exact division

    def body(c, carry):
        acc, bad = carry
        r0 = pl.multiple_of(c * chunk, chunk)
        # Stream native dtype from HBM, upcast in-vreg (VPU has plenty of slack).
        yt = yt_ref[pl.ds(r0, chunk), :].astype(jnp.float32)
        yp = yp_ref[pl.ds(r0, chunk), :].astype(jnp.float32)

        # term1 = y_true * log(y_true / y_pred + 1e-8), zeroed where y_true <= 0
        term1 = yt * jnp.log(yt / yp + 1e-8)
        term1 = jnp.where(yt > 0.0, term1, jnp.zeros_like(term1))
        contrib = term1 - (yt - yp)                      # term1 - term2

        # Pure-VPU reduction: fold the chunk down to a single (8, 128) vreg.
        acc = acc + jnp.sum(
            contrib.reshape(chunk // SUBLANES, SUBLANES, LANES), axis=0)
        bad = bad + jnp.sum(
            (yp <= 0.0).astype(jnp.int32).reshape(
                chunk // SUBLANES, SUBLANES, LANES), axis=0)
        return acc, bad

    acc0 = jnp.zeros((SUBLANES, LANES), jnp.float32)
    bad0 = jnp.zeros((SUBLANES, LANES), jnp.int32)
    acc, bad = jax.lax.fori_loop(0, n_chunks, body, (acc0, bad0), unroll=True)
    sum_ref[...] += acc
    bad_ref[...] += bad


def _stream_dtype(dt):
    """Dtype to stream through HBM (native when layout-friendly) + granularity."""
    dt = jnp.dtype(dt)
    if dt in _STREAM_SUBLANES:
        return dt, _STREAM_SUBLANES[dt]
    return jnp.dtype(jnp.float32), 8


def _chip_config():
    """(max_tile_rows, shards) per TPU generation."""
    kind = ""
    try:
        kind = jax.devices()[0].device_kind.lower()
    except Exception:
        pass
    if "v7" in kind or "tpu7" in kind:
        # 2 TensorCores/chip. 8192-row f32 tiles double-buffered = 16 MiB,
        # inside the 32 MiB scoped-VMEM default (64 MiB physical).
        # TODO(synk): verify in xprof that "parallel" really splits the 2 TCs;
        # otherwise switch the leading axis to pltpu.CORE_PARALLEL.
        return 8192, 2
    if "v6" in kind:
        # single TC, 32 MiB scoped default -> 8192-row tiles (16 MiB) fit.
        return 8192, 1
    # v5e (16 MiB scoped default) and unknown chips: stay conservative (8 MiB).
    return 4096, 1


def _tail_terms(yt, yp):
    """Plain-jnp contribution of the (small) remainder that doesn't fill a tile."""
    yt = yt.astype(jnp.float32)
    yp = yp.astype(jnp.float32)
    term1 = yt * jnp.log(yt / yp + 1e-8)
    term1 = jnp.where(yt > 0.0, term1, jnp.zeros_like(term1))
    contrib = term1 - (yt - yp)
    return jnp.sum(contrib), jnp.sum((yp <= 0.0).astype(jnp.int32))


def poisson_deviance_loss(y_true, y_pred, *, validate=True):
    """Pallas TPU implementation of PoissonDevianceLoss.forward.

    With validate=True the PyTorch ValueError for non-positive predictions is
    reproduced when called eagerly; under jax.jit the flag is still computed
    on-device but the data-dependent raise is skipped (cannot raise while
    tracing).
    """
    yt_dt, yt_gran = _stream_dtype(y_true.dtype)
    yp_dt, yp_gran = _stream_dtype(y_pred.dtype)
    yt_flat = jnp.ravel(y_true)
    yp_flat = jnp.ravel(y_pred)
    if yt_flat.dtype != yt_dt:
        yt_flat = yt_flat.astype(yt_dt)
    if yp_flat.dtype != yp_dt:
        yp_flat = yp_flat.astype(yp_dt)
    n = yt_flat.shape[0]

    max_tile_rows, shards = _chip_config()
    granule = max(yt_gran, yp_gran)                  # sublane multiple for both dtypes

    rows_total = (n // LANES) // granule * granule   # full lane-rows, granule aligned

    bulk_sum = jnp.float32(0.0)
    bulk_bad = jnp.int32(0)
    n_bulk = 0
    if rows_total > 0:
        tile_rows = min(max_tile_rows, rows_total)
        if tile_rows >= CHUNK_ROWS:
            tile_rows = tile_rows // CHUNK_ROWS * CHUNK_ROWS
        num_tiles = rows_total // tile_rows
        shards_eff = shards if num_tiles >= shards else 1
        tiles_per_shard = num_tiles // shards_eff
        num_tiles = tiles_per_shard * shards_eff
        rows_bulk = num_tiles * tile_rows
        n_bulk = rows_bulk * LANES

        # Zero-copy when n_bulk == n (ravel + reshape is metadata only); when a
        # remainder exists only the bulk prefix is sliced -- no padded copy of
        # the inputs (and no mask stream) is ever written.
        yt2 = (yt_flat if n_bulk == n else yt_flat[:n_bulk]).reshape(rows_bulk, LANES)
        yp2 = (yp_flat if n_bulk == n else yp_flat[:n_bulk]).reshape(rows_bulk, LANES)

        in_spec = pl.BlockSpec((tile_rows, LANES),
                               lambda c, i, _t=tiles_per_shard: (c * _t + i, 0))
        acc_spec = pl.BlockSpec((SUBLANES, LANES), lambda c, i: (c, 0))

        sum_out, bad_out = pl.pallas_call(
            _poisson_deviance_kernel,
            out_shape=(
                jax.ShapeDtypeStruct((shards_eff * SUBLANES, LANES), jnp.float32),
                jax.ShapeDtypeStruct((shards_eff * SUBLANES, LANES), jnp.int32),
            ),
            grid_spec=pltpu.PrefetchScalarGridSpec(
                num_scalar_prefetch=0,
                grid=(shards_eff, tiles_per_shard),
                in_specs=[in_spec, in_spec],
                out_specs=[acc_spec, acc_spec],
            ),
            compiler_params=pltpu.CompilerParams(
                dimension_semantics=("parallel", "arbitrary")),
        )(yt2, yp2)
        bulk_sum = jnp.sum(sum_out)
        bulk_bad = jnp.sum(bad_out)

    if n_bulk < n:
        tail_sum, tail_bad = _tail_terms(yt_flat[n_bulk:], yp_flat[n_bulk:])
    else:
        tail_sum, tail_bad = jnp.float32(0.0), jnp.int32(0)

    # Final cross-lane reduce + the factor of 2 from the deviance definition.
    loss = 2.0 * (bulk_sum + tail_sum)

    if validate:
        any_bad = (bulk_bad + tail_bad) > 0
        try:
            bad_concrete = bool(any_bad)
        except (jax.errors.ConcretizationTypeError,
                jax.errors.TracerBoolConversionError):
            # TODO(synk): data-dependent ValueError cannot fire under jax.jit.
            bad_concrete = False
        if bad_concrete:
            raise ValueError("Predicted values must be strictly positive.")

    return loss


def _reference(y_true, y_pred):
    yt = y_true.astype(jnp.float32)
    yp = y_pred.astype(jnp.float32)
    term1 = yt * jnp.log(yt / yp + 1e-8)
    term1 = jnp.where(yt > 0, term1, jnp.zeros_like(term1))
    term2 = yt - yp
    return 2.0 * jnp.sum(term1 - term2)


if __name__ == "__main__":
    key = jax.random.PRNGKey(0)
    k1, k2, k3, k4 = jax.random.split(key, 4)

    # NCHW-style example inputs (2048 elements, lane-aligned -> zero-copy bulk).
    shape = (2, 4, 16, 16)
    # Poisson-like targets (non-negative counts, some exact zeros).
    y_true = jnp.floor(jax.random.gamma(k1, 2.0, shape).astype(jnp.float32))
    # Strictly positive predictions.
    y_pred = jax.random.uniform(k2, shape, jnp.float32, minval=0.1, maxval=3.0)

    # Eager call (exercises the positivity-check path).
    loss = poisson_deviance_loss(y_true, y_pred)
    jax.block_until_ready(loss)
    ref = _reference(y_true, y_pred)
    assert jnp.allclose(loss, ref, rtol=1e-5, atol=1e-3), (loss, ref)

    # Jitted call (validation raise is skipped while tracing; numerics match).
    loss_jit = jax.jit(poisson_deviance_loss)(y_true, y_pred)
    jax.block_until_ready(loss_jit)
    assert jnp.allclose(loss_jit, ref, rtol=1e-5, atol=1e-3), (loss_jit, ref)

    # Non-lane-aligned size: exercises the bulk kernel + plain-jnp tail split.
    shape2 = (7, 13, 17)   # 1547 elements
    y_true2 = jnp.floor(jax.random.gamma(k3, 2.0, shape2).astype(jnp.float32))
    y_pred2 = jax.random.uniform(k4, shape2, jnp.float32, minval=0.1, maxval=3.0)
    loss2 = poisson_deviance_loss(y_true2, y_pred2)
    jax.block_until_ready(loss2)
    ref2 = _reference(y_true2, y_pred2)
    assert jnp.allclose(loss2, ref2, rtol=1e-5, atol=1e-3), (loss2, ref2)

    print("KERNEL_OK")
</pallas_src>

<mosaic_0001>
module attributes {stable_mosaic.version = 11 : i64} {
  func.func @_poisson_deviance_kernel(%arg0: i32, %arg1: i32, %arg2: memref<16x128xf32, #tpu.memory_space<vmem>>, %arg3: memref<16x128xf32, #tpu.memory_space<vmem>>, %arg4: memref<8x128xf32, #tpu.memory_space<vmem>>, %arg5: memref<8x128xi32, #tpu.memory_space<vmem>>) attributes {dimension_semantics = [#tpu.dimension_semantics<parallel>, #tpu.dimension_semantics<arbitrary>], iteration_bounds = array<i64: 1, 1>, scalar_prefetch = 0 : i64, scratch_operands = 0 : i64, tpu.core_type = #tpu.core_type<tc>, window_params = [{transform_indices = @transform_0, window_bounds = array<i64: 16, 128>}, {transform_indices = @transform_1, window_bounds = array<i64: 16, 128>}, {transform_indices = @transform_2, window_bounds = array<i64: 8, 128>}, {transform_indices = @transform_3, window_bounds = array<i64: 8, 128>}]} {
    %c0_i32 = arith.constant 0 : i32
    %0 = arith.cmpi eq, %arg1, %c0_i32 : i32
    %1 = arith.extui %0 : i1 to i32
    %c0_i32_0 = arith.constant 0 : i32
    %2 = arith.cmpi ne, %1, %c0_i32_0 : i32
    scf.if %2 {
      %cst_18 = arith.constant 0.000000e+00 : f32
      %37 = vector.broadcast %cst_18 : f32 to vector<8x128xf32>
      %c0_19 = arith.constant 0 : index
      %c0_20 = arith.constant 0 : index
      %38 = vector.load %arg4[%c0_19, %c0_20] : memref<8x128xf32, #tpu.memory_space<vmem>>, vector<8x128xf32>
      tpu.vector_store %arg4[%c0_19, %c0_20], %37 {strides = array<i32>} : memref<8x128xf32, #tpu.memory_space<vmem>>, vector<8x128xf32>,
      %c0_i32_21 = arith.constant 0 : i32
      %39 = vector.broadcast %c0_i32_21 : i32 to vector<8x128xi32>
      %c0_22 = arith.constant 0 : index
      %c0_23 = arith.constant 0 : index
      %40 = vector.load %arg5[%c0_22, %c0_23] : memref<8x128xi32, #tpu.memory_space<vmem>>, vector<8x128xi32>
      tpu.vector_store %arg5[%c0_22, %c0_23], %39 {strides = array<i32>} : memref<8x128xi32, #tpu.memory_space<vmem>>, vector<8x128xi32>,
    } else {
    }
    %cst = arith.constant 0.000000e+00 : f32
    %3 = vector.broadcast %cst : f32 to vector<8x128xf32>
    %c0_i32_1 = arith.constant 0 : i32
    %4 = vector.broadcast %c0_i32_1 : i32 to vector<8x128xi32>
    %c0_i32_2 = arith.constant 0 : i32
    %c16_i32 = arith.constant 16 : i32
    %5 = arith.muli %c0_i32_2, %c16_i32 : i32
    %6 = tpu.assume_multiple %5, 16 : i32
    %7 = arith.index_cast %6 : i32 to index
    %c0 = arith.constant 0 : index
    %8 = vector.load %arg2[%7, %c0] : memref<16x128xf32, #tpu.memory_space<vmem>>, vector<16x128xf32>
    %9 = arith.index_cast %6 : i32 to index
    %c0_3 = arith.constant 0 : index
    %10 = vector.load %arg3[%9, %c0_3] : memref<16x128xf32, #tpu.memory_space<vmem>>, vector<16x128xf32>
    %11 = arith.divf %8, %10 : vector<16x128xf32>
    %cst_4 = arith.constant 9.99999993E-9 : f32
    %12 = vector.broadcast %cst_4 : f32 to vector<16x128xf32>
    %13 = arith.addf %11, %12 : vector<16x128xf32>
    %14 = math.log %13 : vector<16x128xf32>
    %15 = arith.mulf %8, %14 : vector<16x128xf32>
    %cst_5 = arith.constant 0.000000e+00 : f32
    %16 = vector.broadcast %cst_5 : f32 to vector<16x128xf32>
    %17 = arith.cmpf ogt, %8, %16 : vector<16x128xf32>
    %cst_6 = arith.constant 0.000000e+00 : f32
    %18 = vector.broadcast %cst_6 : f32 to vector<16x128xf32>
    %19 = arith.select %17, %15, %18 : vector<16x128xi1>, vector<16x128xf32>
    %20 = arith.subf %8, %10 : vector<16x128xf32>
    %21 = arith.subf %19, %20 : vector<16x128xf32>
    %22 = vector.shape_cast %21 : vector<16x128xf32> to vector<2x8x128xf32>
    %cst_7 = arith.constant dense<0.000000e+00> : vector<8x128xf32>
    %23 = vector.multi_reduction <add>, %22, %cst_7 [0] : vector<2x8x128xf32> to vector<8x128xf32>
    %24 = arith.addf %3, %23 : vector<8x128xf32>
    %cst_8 = arith.constant 0.000000e+00 : f32
    %25 = vector.broadcast %cst_8 : f32 to vector<16x128xf32>
    %26 = arith.cmpf ole, %10, %25 : vector<16x128xf32>
    %27 = arith.extui %26 : vector<16x128xi1> to vector<16x128xi32>
    %28 = vector.shape_cast %27 : vector<16x128xi32> to vector<2x8x128xi32>
    %cst_9 = arith.constant dense<0> : vector<8x128xi32>
    %29 = vector.multi_reduction <add>, %28, %cst_9 [0] : vector<2x8x128xi32> to vector<8x128xi32>
    %30 = arith.addi %4, %29 : vector<8x128xi32>
    %c1_i32 = arith.constant 1 : i32
    %c0_10 = arith.constant 0 : index
    %c0_11 = arith.constant 0 : index
    %31 = vector.load %arg4[%c0_10, %c0_11] : memref<8x128xf32, #tpu.memory_space<vmem>>, vector<8x128xf32>
    %32 = arith.addf %31, %24 : vector<8x128xf32>
    %c0_12 = arith.constant 0 : index
    %c0_13 = arith.constant 0 : index
    %33 = vector.load %arg4[%c0_12, %c0_13] : memref<8x128xf32, #tpu.memory_space<vmem>>, vector<8x128xf32>
    tpu.vector_store %arg4[%c0_12, %c0_13], %32 {strides = array<i32>} : memref<8x128xf32, #tpu.memory_space<vmem>>, vector<8x128xf32>,
    %c0_14 = arith.constant 0 : index
    %c0_15 = arith.constant 0 : index
    %34 = vector.load %arg5[%c0_14, %c0_15] : memref<8x128xi32, #tpu.memory_space<vmem>>, vector<8x128xi32>
    %35 = arith.addi %34, %30 : vector<8x128xi32>
    %c0_16 = arith.constant 0 : index
    %c0_17 = arith.constant 0 : index
    %36 = vector.load %arg5[%c0_16, %c0_17] : memref<8x128xi32, #tpu.memory_space<vmem>>, vector<8x128xi32>
    tpu.vector_store %arg5[%c0_16, %c0_17], %35 {strides = array<i32>} : memref<8x128xi32, #tpu.memory_space<vmem>>, vector<8x128xi32>,
    return
  }
  func.func @transform_0(%arg0: i32, %arg1: i32) -> (i32, i32) {
    %c1_i32 = arith.constant 1 : i32
    %0 = arith.muli %arg0, %c1_i32 : i32
    %1 = arith.addi %0, %arg1 : i32
    %c0_i32 = arith.constant 0 : i32
    %c0_i32_0 = arith.constant 0 : i32
    return %1, %c0_i32 : i32, i32
  }
  func.func @transform_1(%arg0: i32, %arg1: i32) -> (i32, i32) {
    %c1_i32 = arith.constant 1 : i32
    %0 = arith.muli %arg0, %c1_i32 : i32
    %1 = arith.addi %0, %arg1 : i32
    %c0_i32 = arith.constant 0 : i32
    %c0_i32_0 = arith.constant 0 : i32
    return %1, %c0_i32 : i32, i32
  }
  func.func @transform_2(%arg0: i32, %arg1: i32) -> (i32, i32) {
    %c0_i32 = arith.constant 0 : i32
    %c0_i32_0 = arith.constant 0 : i32
    return %arg0, %c0_i32 : i32, i32
  }
  func.func @transform_3(%arg0: i32, %arg1: i32) -> (i32, i32) {
    %c0_i32 = arith.constant 0 : i32
    %c0_i32_0 = arith.constant 0 : i32
    return %arg0, %c0_i32 : i32, i32
  }
}

</mosaic_0001>

<llo_original>
// kernel: tpu_custom_call.1
$region0: #{tpu_custom_call.1}
  #allocation0 [shape = 'u32[]', space=smem, size = 0x4, offset = 0x4, fixed_abs, tag = 'smem constant byte address 0x4 - core index']
  #allocation1 [shape = 'u32[144,128]{1,0:T(1,128)}', space=vmem, size = 0x12000, scoped, tag = 'internal scratch']
  %s0 = inlined_call_operand.hbm [shape: f32[16,128], index: 0, kind: input, shape index: {}]
  %s1 = inlined_call_operand.hbm [shape: f32[16,128], index: 1, kind: input, shape index: {}]
  %s2 = inlined_call_operand.hbm [shape: f32[8,128], index: 2, kind: output, shape index: {0}]
  %s3 = inlined_call_operand.hbm [shape: s32[8,128], index: 3, kind: output, shape index: {1}]
  %4 = xla_tuple %s2, %s3
  %s5 = sld [smem:[#allocation0]]
  $region38: #{tpu_custom_call.1} parent=0
    _
  %s7 = ssub.s32 1, %s5
  %s8 = scalar_select 0, %s7, %s5
  $region1: #{tpu_custom_call.1} parent=0
    #allocation2 [shape = 'u8[8192]{0}', space=vmem, size = 0x2000, scoped, tag = 'input window, operand 0, single buffered']
    #allocation3 [shape = 's32[1]{0}', space=sflag, size = 0x4, scoped, tag = 'scoped memory for tpu_custom_call.1']
    #allocation4 [shape = 's32[1]{0}', space=sflag, size = 0x4, scoped, tag = 'scoped memory for tpu_custom_call.1']
    #allocation5 [shape = 'u8[8192]{0}', space=vmem, size = 0x2000, scoped, tag = 'input window, operand 1, single buffered']
    #allocation6 [shape = 's32[1]{0}', space=sflag, size = 0x4, scoped, tag = 'scoped memory for tpu_custom_call.1']
    #allocation7 [shape = 'u8[4096]{0}', space=vmem, size = 0x1000, scoped, tag = 'output window, operand 0, single buffered']
    #allocation8 [shape = 'u8[4096]{0}', space=vmem, size = 0x1000, scoped, tag = 'output window, operand 1, single buffered']
    #allocation9 [shape = 's32[1]{0}', space=sflag, size = 0x4, scoped, tag = 'scoped memory for tpu_custom_call.1']
    %9 = vsyncpa [#allocation3], 0
    %10 = vsyncpa [#allocation6], 0
    %11 = vsyncpa [#allocation4], 0
    %12 = vsyncpa [#allocation9], 0
    // Predicated region
    $region2: #{tpu_custom_call.1} parent=1 // pred_check
      _
    $region3: #{tpu_custom_call.1} parent=1 // pred_check_branch
      %14 = sbr.rel (0) target = $region5
    $region4: #{tpu_custom_call.1} parent=1 // pred_region
      %s15 = sadd.s32 0, 0
      %s16 = smul.u32 2, %s15
      %s18 = ssub.s32 256, 256
      %19 = vsyncadd [#allocation3], %s18
      %s20 = smul.addr %s16, 128
      %s21 = scalar_lea.hbm %s0, %s20
      %s22 = sshll.u32 [#allocation2], 4
      %s23 = int_to_ptr.vmem [resolvable:$true] %s22
      %28 = dma.hbm_to_vmem [thread:$0]  %s21, 256, %s23, [#allocation3], 128, 128, 8
    $region5: #{tpu_custom_call.1} parent=1 // pred_fallthru
      _
    // Predicated region
    $region6: #{tpu_custom_call.1} parent=1 // pred_check
      _
    $region7: #{tpu_custom_call.1} parent=1 // pred_check_branch
      %30 = sbr.rel (0) target = $region9
    $region8: #{tpu_custom_call.1} parent=1 // pred_region
      %s31 = sadd.s32 0, 0
      %s32 = smul.u32 2, %s31
      %s34 = ssub.s32 256, 256
      %35 = vsyncadd [#allocation6], %s34
      %s36 = smul.addr %s32, 128
      %s37 = scalar_lea.hbm %s1, %s36
      %s38 = sshll.u32 [#allocation5], 4
      %s39 = int_to_ptr.vmem [resolvable:$true] %s38
      %44 = dma.hbm_to_vmem [thread:$0]  %s37, 256, %s39, [#allocation6], 128, 128, 8
    $region9: #{tpu_custom_call.1} parent=1 // pred_fallthru
      _
    // Predicated region
    $region10: #{tpu_custom_call.1} parent=1 // pred_check
      _
    $region11: #{tpu_custom_call.1} parent=1 // pred_check_branch
      %46 = sbr.rel (0) target = $region13
    $region12: #{tpu_custom_call.1} parent=1 // pred_region
      %47 = dma.done [#allocation3], 256
    $region13: #{tpu_custom_call.1} parent=1 // pred_fallthru
      _
    // Predicated region
    $region14: #{tpu_custom_call.1} parent=1 // pred_check
      _
    $region15: #{tpu_custom_call.1} parent=1 // pred_check_branch
      %49 = sbr.rel (0) target = $region17
    $region16: #{tpu_custom_call.1} parent=1 // pred_region
      %50 = dma.done [#allocation6], 256
    $region17: #{tpu_custom_call.1} parent=1 // pred_fallthru
      _
    %s51 = sadd.s32 0, 0
    %s52 = smul.u32 2, %s51
    %s53 = sadd.s32 0, 0
    %s54 = smul.u32 2, %s53
    %p55 = scmp.eq.s32.totalorder 0, 0
    // Predicated region
    $region18: #{tpu_custom_call.1} parent=1 // pred_check
      %p56 = pneg %p55
    $region19: #{tpu_custom_call.1} parent=1 // pred_check_branch
      %58 = sbr.rel (%p56) target = $region21
    $region20: #{tpu_custom_call.1} parent=1 // pred_region
      %59 = vst [vmem:[#allocation7] sm:$0xff] 0.0
      %60 = vst [vmem:[#allocation8] sm:$0xff] 0
    $region21: #{tpu_custom_call.1} parent=1 // pred_fallthru
      _
    %v61 = vld [vmem:[#allocation2] sm:$0xff]
    %v62 = vld [vmem:[#allocation2 + $0x8] sm:$0xff]
    %v63 = vld [vmem:[#allocation5] sm:$0xff]
    %v64 = vld [vmem:[#allocation5 + $0x8] sm:$0xff]
    %v65 = vrcp.pop %v63
    %v66 = vmul.f32 %v61, %v65
    %v67 = vrcp.pop %v64
    %v68 = vmul.f32 %v62, %v67
    %v69 = vadd.f32 %v66, 1e-08
    %v70 = vadd.f32 %v68, 1e-08
    %v71 = vlog2.pop %v69
    %v72 = vmul.f32 %v71, 0.6931472
    %v73 = vlog2.pop %v70
    %v74 = vmul.f32 %v73, 0.6931472
    %v75 = vmul.f32 %v61, %v72
    %v76 = vmul.f32 %v62, %v74
    %vm77 = vcmp.gt.f32.partialorder %v61, 0.0
    %vm78 = vcmp.gt.f32.partialorder %v62, 0.0
    %v79 = vsel %vm77, %v75, 0.0
    %v80 = vsel %vm78, %v76, 0.0
    %v81 = vsub.f32 %v61, %v63
    %v82 = vsub.f32 %v62, %v64
    %v83 = vsub.f32 %v79, %v81
    %v84 = vsub.f32 %v80, %v82
    %v85 = vadd.f32 %v83, %v84
    %v86 = vadd.f32 %v85, 0.0
    %vm87 = vcmp.le.f32.partialorder %v63, 0.0
    %vm88 = vcmp.le.f32.partialorder %v64, 0.0
    %v89 = vsel %vm87, 1, 0
    %v90 = vsel %vm88, 1, 0
    %v91 = vadd.s32 %v89, %v90
    %v92 = vld [vmem:[#allocation7] sm:$0xff]
    %v93 = vadd.f32 %v92, %v86
    %94 = vst [vmem:[#allocation7] sm:$0xff] %v93
    %v95 = vld [vmem:[#allocation8] sm:$0xff]
    %v96 = vadd.s32 %v95, %v91
    %97 = vst [vmem:[#allocation8] sm:$0xff] %v96
    // Predicated region
    $region22: #{tpu_custom_call.1} parent=1 // pred_check
      _
    $region23: #{tpu_custom_call.1} parent=1 // pred_check_branch
      %99 = sbr.rel (0) target = $region25
    $region24: #{tpu_custom_call.1} parent=1 // pred_region
      %s101 = ssub.s32 128, 128
      %102 = vsyncadd [#allocation4], %s101
      %s104 = sshll.u32 [#allocation7], 4
      %s105 = int_to_ptr.vmem [resolvable:$true] %s104
      %107 = dma.vmem_to_hbm [thread:$0]  %s105, 128, %s2, [#allocation4]
    $region25: #{tpu_custom_call.1} parent=1 // pred_fallthru
      _
    // Predicated region
    $region26: #{tpu_custom_call.1} parent=1 // pred_check
      _
    $region27: #{tpu_custom_call.1} parent=1 // pred_check_branch
      %109 = sbr.rel (0) target = $region29
    $region28: #{tpu_custom_call.1} parent=1 // pred_region
      %s111 = ssub.s32 128, 128
      %112 = vsyncadd [#allocation9], %s111
      %s114 = sshll.u32 [#allocation8], 4
      %s115 = int_to_ptr.vmem [resolvable:$true] %s114
      %117 = dma.vmem_to_hbm [thread:$0]  %s115, 128, %s3, [#allocation9]
    $region29: #{tpu_custom_call.1} parent=1 // pred_fallthru
      _
    // Predicated region
    $region30: #{tpu_custom_call.1} parent=1 // pred_check
      _
    $region31: #{tpu_custom_call.1} parent=1 // pred_check_branch
      %119 = sbr.rel (0) target = $region33
    $region32: #{tpu_custom_call.1} parent=1 // pred_region
      %120 = dma.done [#allocation4], 128
    $region33: #{tpu_custom_call.1} parent=1 // pred_fallthru
      _
    // Predicated region
    $region34: #{tpu_custom_call.1} parent=1 // pred_check
      _
    $region35: #{tpu_custom_call.1} parent=1 // pred_check_branch
      %122 = sbr.rel (0) target = $region37
    $region36: #{tpu_custom_call.1} parent=1 // pred_region
      %123 = dma.done [#allocation9], 128
    $region37: #{tpu_custom_call.1} parent=1 // pred_fallthru
      _
    %124 = vsyncpa [#allocation3], 1
    %125 = vsyncpa [#allocation6], 1
    %126 = vsyncpa [#allocation4], 1
    %127 = vsyncpa [#allocation9], 1

</llo_original>
